<compile_context>
chip_gen: v7x
topology: tpu7x:2x2x1
jax: 0.10.0
libtpu: 0.0.40
codegen_flags: <defaults>
</compile_context>

<pallas_src>
import functools
from typing import NamedTuple, Tuple

import jax
import jax.numpy as jnp
from jax.experimental import pallas as pl
from jax.experimental.pallas import tpu as pltpu


# ----------------------------------------------------------------------------
# Generation-aware tunables
# ----------------------------------------------------------------------------
_M_ALIGN = 16                   # sublane alignment (safe for f32 and bf16)
_LANE = 128                     # lane width


def _round_up(x: int, m: int) -> int:
    return ((x + m - 1) // m) * m


def _vmem_capacity_bytes() -> int:
    try:
        return int(pltpu.get_tpu_info().vmem_capacity_bytes)
    except Exception:
        return 64 * 1024 * 1024   # conservative: v7x per-TensorCore VMEM


_VMEM_CAP = _vmem_capacity_bytes()
_BIG_VMEM = _VMEM_CAP >= 96 * 1024 * 1024      # v5e / v6e class (128 MiB)
# Heuristic: 64 MiB-per-core parts are the 2-TensorCore (v7x) generation.
_ASSUME_TWO_TC = not _BIG_VMEM
_VMEM_LIMIT = max(32 << 20, min(int(_VMEM_CAP * 0.75), _VMEM_CAP - (16 << 20)))
_FUSE_VMEM_BUDGET = int(_VMEM_LIMIT * 0.7)

# Fallback tile targets: bigger on the 128 MiB parts (cuts grid-step overhead
# and HBM re-reads), 256/512/512 on v7x.
_TM = 512 if _BIG_VMEM else 256
_TN = 1024 if _BIG_VMEM else 512
_TK = 1024 if _BIG_VMEM else 512

# Single-buffering marker for grid-invariant blocks (resident weights/biases).
try:
    _BUFFERED_ONE = pl.Buffered(1)
except Exception:  # very old pallas: fall back to default double-buffering
    _BUFFERED_ONE = None


def _pad_width(s: int) -> int:
    """Lane-dense padding; above one lane tile pad to multiples of 256 so the
    fallback N/K tiles never degenerate below the 256-wide MXU."""
    return _LANE if s <= _LANE else _round_up(s, 2 * _LANE)


def _pick_tile(padded_dim: int, target: int) -> int:
    """Largest aligned tile that divides `padded_dim` and is <= target."""
    align = 2 * _LANE if (padded_dim % (2 * _LANE) == 0
                          and target >= 2 * _LANE) else _LANE
    best = min(align, padded_dim)
    t = align
    limit = min(target, padded_dim)
    while t <= limit:
        if padded_dim % t == 0:
            best = t
        t += align
    return best


def _choose_tm(m: int, target: int, *, min_parallel_steps: int = 1):
    """Pick the M tile: multiple of _M_ALIGN minimizing padded-row waste, then
    (on 2-TensorCore parts) shrink until there are >= 2 parallel grid steps."""
    m = max(int(m), 1)
    if m <= _LANE:
        best_tm = _round_up(m, _M_ALIGN)
        best_mp = best_tm
    else:
        candidates = []
        t = _LANE
        while t <= target:
            candidates.append(t)
            t *= 2
        if not candidates:
            candidates = [_LANE]
        best_tm, best_mp = None, None
        for t in candidates:
            mp = _round_up(m, t)
            if best_mp is None or mp < best_mp or (mp == best_mp and t > best_tm):
                best_tm, best_mp = t, mp
    while best_mp // best_tm < min_parallel_steps and best_tm > _M_ALIGN:
        best_tm = max(_M_ALIGN, (best_tm // 2) // _M_ALIGN * _M_ALIGN)
        best_mp = _round_up(m, best_tm)
    return best_tm, best_mp


# ----------------------------------------------------------------------------
# Parameter init / preparation (transpose + pad + cast ONCE, off the hot path)
# ----------------------------------------------------------------------------
class PreparedMLP(NamedTuple):
    weights: Tuple[jax.Array, ...]   # each (Kp, Np), lane-padded, pre-transposed
    biases: Tuple[jax.Array, ...]    # each (1, Np), float32, lane-padded
    layer_sizes: Tuple[int, ...]     # true (unpadded) widths [K0, N1, ..., NL]


def init_column_parallel_mlp_params(key, layer_sizes, init_method_std=0.02,
                                    dtype=jnp.float32):
    """Matches the Megatron ColumnParallelLinear init: weight (out, in) ~
    N(0, std), bias zeros.  Weights are transposed ONCE here to (in, out) so
    the forward pass never pays a per-call HBM transpose."""
    params = []
    for in_size, out_size in zip(layer_sizes[:-1], layer_sizes[1:]):
        key, wk = jax.random.split(key)
        w = init_method_std * jax.random.normal(wk, (out_size, in_size), dtype=dtype)
        b = jnp.zeros((out_size,), dtype=dtype)
        params.append((jnp.transpose(w), b))  # stored as (K, N)
    return params


def prepare_mlp_params(params, *, compute_dtype=jnp.bfloat16) -> PreparedMLP:
    """Pad all widths to lane-dense multiples (unmasked stores) and cast
    weights to the MXU compute dtype (bf16 by default: ~2-4x MXU throughput
    and half the weight DMA, with f32 accumulation preserved in the kernels).
    Runs once, outside the hot path.  Biases stay float32 (post-accumulate)."""
    sizes = [params[0][0].shape[0]] + [w.shape[1] for w, _ in params]
    padded = [_pad_width(s) for s in sizes]
    weights, biases = [], []
    for li, (w, b) in enumerate(params):
        kp, np_ = padded[li], padded[li + 1]
        wp = jnp.pad(w, ((0, kp - w.shape[0]), (0, np_ - w.shape[1])))
        if compute_dtype is not None:
            wp = wp.astype(compute_dtype)
        bp = jnp.pad(b.astype(jnp.float32), (0, np_ - b.shape[0])).reshape(1, np_)
        weights.append(wp)
        biases.append(bp)
    return PreparedMLP(tuple(weights), tuple(biases), tuple(sizes))


# ----------------------------------------------------------------------------
# Kernel 1: whole-MLP fusion, tiled over M only (weights resident in VMEM)
# ----------------------------------------------------------------------------
def _make_fused_kernel(n_layers: int):
    def kernel(*refs):
        x_ref = refs[0]
        o_ref = refs[1 + 2 * n_layers]
        h = x_ref[...]
        for layer in range(n_layers):
            w_ref = refs[1 + 2 * layer]
            b_ref = refs[2 + 2 * layer]
            h = jnp.dot(h.astype(w_ref.dtype), w_ref[...],
                        preferred_element_type=jnp.float32)
            h = h + b_ref[...]                      # f32 bias, f32 accumulate
            if layer != n_layers - 1:
                h = jnp.maximum(h, 0.0)             # ReLU between layers only
        o_ref[...] = h.astype(o_ref.dtype)
    return kernel


def _resident_spec(shape):
    """Grid-invariant block (constant index_map): single-buffer it so resident
    weights/biases don't pay 2x VMEM (critical under v7x's 64 MiB)."""
    if _BUFFERED_ONE is not None:
        try:
            return pl.BlockSpec(shape, lambda i: (0, 0),
                                pipeline_mode=_BUFFERED_ONE)
        except TypeError:
            pass
    return pl.BlockSpec(shape, lambda i: (0, 0))


def _fused_vmem_bytes(tm, weights, biases, act_dtype, out_dtype) -> int:
    wbuf = 1 if _BUFFERED_ONE is not None else 2   # resident -> single buffer
    total = 0
    for w, b in zip(weights, biases):
        total += wbuf * (w.size * w.dtype.itemsize + b.size * b.dtype.itemsize)
    # double-buffered x input tile and output tile
    total += 2 * tm * weights[0].shape[0] * jnp.dtype(act_dtype).itemsize
    total += 2 * tm * weights[-1].shape[1] * jnp.dtype(out_dtype).itemsize
    # live f32 intermediates (two widest layers) + compute-dtype cast temp
    widths = sorted((w.shape[1] for w in weights), reverse=True)
    widest = widths[0]
    second = widths[1] if len(widths) > 1 else 0
    total += tm * (widest + second) * 4
    total += tm * widest * jnp.dtype(act_dtype).itemsize
    return total


def _mlp_fused(xp, weights, biases, *, out_dtype, tm):
    mp, k0p = xp.shape
    n_layers = len(weights)
    np_last = weights[-1].shape[1]

    in_specs = [pl.BlockSpec((tm, k0p), lambda i: (i, 0))]
    operands = [xp]
    for w, b in zip(weights, biases):
        kp, np_ = w.shape
        in_specs.append(_resident_spec((kp, np_)))   # VMEM-resident weight
        in_specs.append(_resident_spec((1, np_)))    # VMEM-resident bias
        operands += [w, b]

    flops = sum(2 * mp * w.shape[0] * w.shape[1] for w in weights)
    bytes_accessed = (xp.size * xp.dtype.itemsize
                      + sum(w.size * w.dtype.itemsize for w in weights)
                      + sum(b.size * b.dtype.itemsize for b in biases)
                      + mp * np_last * jnp.dtype(out_dtype).itemsize)

    return pl.pallas_call(
        _make_fused_kernel(n_layers),
        out_shape=jax.ShapeDtypeStruct((mp, np_last), out_dtype),
        grid_spec=pltpu.PrefetchScalarGridSpec(
            num_scalar_prefetch=0,
            grid=(mp // tm,),
            in_specs=in_specs,
            out_specs=pl.BlockSpec((tm, np_last), lambda i: (i, 0)),
        ),
        compiler_params=pltpu.CompilerParams(
            dimension_semantics=("parallel",),
            vmem_limit_bytes=_VMEM_LIMIT,
        ),
        cost_estimate=pl.CostEstimate(flops=flops, transcendentals=0,
                                      bytes_accessed=bytes_accessed),
    )(*operands)


# ----------------------------------------------------------------------------
# Kernel 2: per-layer (M, N, K)-tiled linear with f32 accumulator + epilogue
# ----------------------------------------------------------------------------
def _tiled_linear_kernel(x_ref, w_ref, b_ref, o_ref, acc_ref, *, relu):
    k = pl.program_id(2)

    @pl.when(k == 0)
    def _():
        acc_ref[...] = jnp.zeros_like(acc_ref)

    acc_ref[...] += jnp.dot(x_ref[...], w_ref[...],
                            preferred_element_type=jnp.float32)

    @pl.when(k == pl.num_programs(2) - 1)
    def _():
        y = acc_ref[...] + b_ref[...]      # bias/ReLU/cast only in the epilogue
        if relu:
            y = jnp.maximum(y, 0.0)
        o_ref[...] = y.astype(o_ref.dtype)


def _linear_tiled(xp, w, b, *, relu, out_dtype, tm, tn, tk):
    mp, kp = xp.shape
    kp2, np_ = w.shape
    assert kp == kp2
    grid = (mp // tm, np_ // tn, kp // tk)

    flops = 2 * mp * np_ * kp
    bytes_accessed = (xp.size * xp.dtype.itemsize + w.size * w.dtype.itemsize
                      + b.size * b.dtype.itemsize
                      + mp * np_ * jnp.dtype(out_dtype).itemsize)

    return pl.pallas_call(
        functools.partial(_tiled_linear_kernel, relu=relu),
        out_shape=jax.ShapeDtypeStruct((mp, np_), out_dtype),
        grid_spec=pltpu.PrefetchScalarGridSpec(
            num_scalar_prefetch=0,
            grid=grid,
            in_specs=[
                pl.BlockSpec((tm, tk), lambda i, j, k: (i, k)),
                pl.BlockSpec((tk, tn), lambda i, j, k: (k, j)),
                pl.BlockSpec((1, tn), lambda i, j, k: (0, j)),
            ],
            out_specs=pl.BlockSpec((tm, tn), lambda i, j, k: (i, j)),
            scratch_shapes=[pltpu.VMEM((tm, tn), jnp.float32)],
        ),
        compiler_params=pltpu.CompilerParams(
            dimension_semantics=("parallel", "parallel", "arbitrary"),
            vmem_limit_bytes=_VMEM_LIMIT,
        ),
        cost_estimate=pl.CostEstimate(flops=flops, transcendentals=0,
                                      bytes_accessed=bytes_accessed),
    )(xp, w, b)


# ----------------------------------------------------------------------------
# Forward pass
# ----------------------------------------------------------------------------
def column_parallel_mlp_forward(x, prepared: PreparedMLP, *, fuse="auto"):
    """linear -> ReLU -> ... -> linear (no final activation)."""
    sizes = prepared.layer_sizes
    k0, n_last = sizes[0], sizes[-1]
    assert x.shape[-1] == k0
    lead = x.shape[:-1]
    out_dtype = x.dtype

    weights, biases = prepared.weights, prepared.biases
    compute_dtype = weights[0].dtype
    k0p = weights[0].shape[0]
    n_lastp = weights[-1].shape[1]

    x2d = x.reshape(-1, k0)
    m = x2d.shape[0]
    # >= 2 parallel M steps on 2-TensorCore (v7x) parts so neither core idles.
    min_steps = 2 if _ASSUME_TWO_TC else 1
    tm, mp = _choose_tm(m, _TM, min_parallel_steps=min_steps)

    xp = x2d.astype(compute_dtype)
    if (mp, k0p) != (m, k0):
        xp = jnp.pad(xp, ((0, mp - m), (0, k0p - k0)))

    if fuse == "auto":
        use_fused = (_fused_vmem_bytes(tm, weights, biases, compute_dtype,
                                       out_dtype) <= _FUSE_VMEM_BUDGET)
    else:
        use_fused = bool(fuse)

    if use_fused:
        out_p = _mlp_fused(xp, weights, biases, out_dtype=out_dtype, tm=tm)
    else:
        # Fallback: the N grid axis is also "parallel", so even small-M shapes
        # expose work for both v7x TensorCores when np_//tn >= 2.
        h = xp
        n_layers = len(weights)
        for li, (w, b) in enumerate(zip(weights, biases)):
            is_last = li == n_layers - 1
            layer_out_dtype = out_dtype if is_last else compute_dtype
            tn = _pick_tile(w.shape[1], _TN)
            tk = _pick_tile(w.shape[0], _TK)
            h = _linear_tiled(h, w, b, relu=not is_last,
                              out_dtype=layer_out_dtype, tm=tm, tn=tn, tk=tk)
        out_p = h

    # Skip the HBM copy when no padding was added.
    if m == mp and n_last == n_lastp:
        out = out_p
    else:
        out = out_p[:m, :n_last]
    return out.reshape(*lead, n_last)


# ----------------------------------------------------------------------------
# Demo / self-test
# ----------------------------------------------------------------------------
if __name__ == "__main__":
    layer_sizes = [32, 64, 16]
    key = jax.random.PRNGKey(0)
    key, xk = jax.random.split(key)
    x = jax.random.normal(xk, (2, 8, layer_sizes[0]), dtype=jnp.float32)

    raw = init_column_parallel_mlp_params(key, layer_sizes)

    # Pure-JAX reference: same math (weights already stored as (K, N)).
    ref = x.reshape(-1, layer_sizes[0])
    for li, (w_kn, b) in enumerate(raw):
        ref = ref @ w_kn + b
        if li != len(raw) - 1:
            ref = jnp.maximum(ref, 0.0)
    ref = ref.reshape(2, 8, layer_sizes[-1])

    # 1) Fused whole-MLP kernel, full f32 compute.
    prep_f32 = prepare_mlp_params(raw, compute_dtype=jnp.float32)
    out_fused = jax.block_until_ready(
        column_parallel_mlp_forward(x, prep_f32, fuse=True))
    assert out_fused.shape == ref.shape
    assert jnp.allclose(out_fused, ref, atol=1e-5, rtol=1e-5)

    # 2) Per-layer (M, N, K)-tiled fallback path, full f32 compute.
    out_tiled = jax.block_until_ready(
        column_parallel_mlp_forward(x, prep_f32, fuse=False))
    assert jnp.allclose(out_tiled, ref, atol=1e-5, rtol=1e-5)

    # 3) Default path: bf16 MXU compute (f32 accumulate / f32 bias epilogue),
    #    auto fused-vs-tiled selection; looser tolerance.
    prep_bf16 = prepare_mlp_params(raw)
    out_bf16 = jax.block_until_ready(
        column_parallel_mlp_forward(x, prep_bf16))
    assert out_bf16.shape == ref.shape
    assert jnp.allclose(out_bf16.astype(jnp.float32), ref,
                        atol=5e-2, rtol=5e-2)

    print("KERNEL_OK")
</pallas_src>

<mosaic_0001>
module attributes {stable_mosaic.version = 11 : i64} {
  func.func @kernel(%arg0: i32, %arg1: memref<16x128xf32, #tpu.memory_space<vmem>>, %arg2: memref<128x128xf32, #tpu.memory_space<vmem>>, %arg3: memref<1x128xf32, #tpu.memory_space<vmem>>, %arg4: memref<128x128xf32, #tpu.memory_space<vmem>>, %arg5: memref<1x128xf32, #tpu.memory_space<vmem>>, %arg6: memref<16x128xf32, #tpu.memory_space<vmem>>) attributes {dimension_semantics = [#tpu.dimension_semantics<parallel>], iteration_bounds = array<i64: 1>, scalar_prefetch = 0 : i64, scratch_operands = 0 : i64, tpu.core_type = #tpu.core_type<tc>, window_params = [{transform_indices = @transform_0, window_bounds = array<i64: 16, 128>}, {pipeline_mode = #tpu.pipeline_mode<synchronous>, transform_indices = @transform_1, window_bounds = array<i64: 128, 128>}, {pipeline_mode = #tpu.pipeline_mode<synchronous>, transform_indices = @transform_2, window_bounds = array<i64: 1, 128>}, {pipeline_mode = #tpu.pipeline_mode<synchronous>, transform_indices = @transform_3, window_bounds = array<i64: 128, 128>}, {pipeline_mode = #tpu.pipeline_mode<synchronous>, transform_indices = @transform_4, window_bounds = array<i64: 1, 128>}, {transform_indices = @transform_5, window_bounds = array<i64: 16, 128>}]} {
    %c0 = arith.constant 0 : index
    %c0_0 = arith.constant 0 : index
    %0 = vector.load %arg1[%c0, %c0_0] : memref<16x128xf32, #tpu.memory_space<vmem>>, vector<16x128xf32>
    %c0_1 = arith.constant 0 : index
    %c0_2 = arith.constant 0 : index
    %1 = vector.load %arg2[%c0_1, %c0_2] : memref<128x128xf32, #tpu.memory_space<vmem>>, vector<128x128xf32>
    %cst = arith.constant dense<0.000000e+00> : vector<16x128xf32>
    %2 = tpu.matmul %0, %1, %cst {dimension_numbers = #tpu.dot_dimension_numbers<[1], [0], [0], [1], [0, 0, 1, 1], [], []>} : vector<16x128xf32>, vector<128x128xf32>, vector<16x128xf32> -> vector<16x128xf32>
    %c0_3 = arith.constant 0 : index
    %c0_4 = arith.constant 0 : index
    %3 = vector.load %arg3[%c0_3, %c0_4] : memref<1x128xf32, #tpu.memory_space<vmem>>, vector<1x128xf32>
    %4 = vector.broadcast %3 : vector<1x128xf32> to vector<16x128xf32>
    %5 = arith.addf %2, %4 : vector<16x128xf32>
    %cst_5 = arith.constant 0.000000e+00 : f32
    %6 = vector.broadcast %cst_5 : f32 to vector<16x128xf32>
    %7 = arith.maximumf %5, %6 : vector<16x128xf32>
    %c0_6 = arith.constant 0 : index
    %c0_7 = arith.constant 0 : index
    %8 = vector.load %arg4[%c0_6, %c0_7] : memref<128x128xf32, #tpu.memory_space<vmem>>, vector<128x128xf32>
    %cst_8 = arith.constant dense<0.000000e+00> : vector<16x128xf32>
    %9 = tpu.matmul %7, %8, %cst_8 {dimension_numbers = #tpu.dot_dimension_numbers<[1], [0], [0], [1], [0, 0, 1, 1], [], []>} : vector<16x128xf32>, vector<128x128xf32>, vector<16x128xf32> -> vector<16x128xf32>
    %c0_9 = arith.constant 0 : index
    %c0_10 = arith.constant 0 : index
    %10 = vector.load %arg5[%c0_9, %c0_10] : memref<1x128xf32, #tpu.memory_space<vmem>>, vector<1x128xf32>
    %11 = vector.broadcast %10 : vector<1x128xf32> to vector<16x128xf32>
    %12 = arith.addf %9, %11 : vector<16x128xf32>
    %c0_11 = arith.constant 0 : index
    %c0_12 = arith.constant 0 : index
    %13 = vector.load %arg6[%c0_11, %c0_12] : memref<16x128xf32, #tpu.memory_space<vmem>>, vector<16x128xf32>
    tpu.vector_store %arg6[%c0_11, %c0_12], %12 {strides = array<i32>} : memref<16x128xf32, #tpu.memory_space<vmem>>, vector<16x128xf32>,
    return
  }
  func.func @transform_0(%arg0: i32) -> (i32, i32) {
    %c0_i32 = arith.constant 0 : i32
    %c0_i32_0 = arith.constant 0 : i32
    return %arg0, %c0_i32 : i32, i32
  }
  func.func @transform_1(%arg0: i32) -> (i32, i32) {
    %c0_i32 = arith.constant 0 : i32
    %c0_i32_0 = arith.constant 0 : i32
    %c0_i32_1 = arith.constant 0 : i32
    return %c0_i32, %c0_i32_0 : i32, i32
  }
  func.func @transform_2(%arg0: i32) -> (i32, i32) {
    %c0_i32 = arith.constant 0 : i32
    %c0_i32_0 = arith.constant 0 : i32
    %c0_i32_1 = arith.constant 0 : i32
    return %c0_i32, %c0_i32_0 : i32, i32
  }
  func.func @transform_3(%arg0: i32) -> (i32, i32) {
    %c0_i32 = arith.constant 0 : i32
    %c0_i32_0 = arith.constant 0 : i32
    %c0_i32_1 = arith.constant 0 : i32
    return %c0_i32, %c0_i32_0 : i32, i32
  }
  func.func @transform_4(%arg0: i32) -> (i32, i32) {
    %c0_i32 = arith.constant 0 : i32
    %c0_i32_0 = arith.constant 0 : i32
    %c0_i32_1 = arith.constant 0 : i32
    return %c0_i32, %c0_i32_0 : i32, i32
  }
  func.func @transform_5(%arg0: i32) -> (i32, i32) {
    %c0_i32 = arith.constant 0 : i32
    %c0_i32_0 = arith.constant 0 : i32
    return %arg0, %c0_i32 : i32, i32
  }
}

</mosaic_0001>

<llo_original>
// kernel: tpu_custom_call.1
$region0: #{tpu_custom_call.1}
  #allocation0 [shape = 'u32[]', space=smem, size = 0x4, offset = 0x4, fixed_abs, tag = 'smem constant byte address 0x4 - core index']
  #allocation1 [shape = 'u32[144,128]{1,0:T(1,128)}', space=vmem, size = 0x12000, scoped, tag = 'internal scratch']
  %s0 = inlined_call_operand.hbm [shape: f32[16,128], index: 0, kind: input, shape index: {}]
  %s1 = inlined_call_operand.hbm [shape: f32[128,128], index: 1, kind: input, shape index: {}]
  %s2 = inlined_call_operand.vmem [shape: f32[1,128], index: 2, kind: input, shape index: {}]
  %s3 = inlined_call_operand.hbm [shape: f32[128,128], index: 3, kind: input, shape index: {}]
  %s4 = inlined_call_operand.vmem [shape: f32[1,128], index: 4, kind: input, shape index: {}]
  %s5 = inlined_call_operand.hbm [shape: f32[16,128], index: 5, kind: output, shape index: {}]
  %s6 = sld [smem:[#allocation0]]
  $region42: #{tpu_custom_call.1} parent=0
    _
  %s8 = ssub.s32 1, %s6
  %s9 = scalar_select 0, %s8, %s6
  $region1: #{tpu_custom_call.1} parent=0
    #allocation2 [shape = 'u8[8192]{0}', space=vmem, size = 0x2000, scoped, tag = 'input window, operand 0, single buffered']
    #allocation3 [shape = 's32[1]{0}', space=sflag, size = 0x4, scoped, tag = 'scoped memory for tpu_custom_call.1']
    #allocation4 [shape = 's32[1]{0}', space=sflag, size = 0x4, scoped, tag = 'scoped memory for tpu_custom_call.1']
    #allocation5 [shape = 'u8[65536]{0}', space=vmem, size = 0x10000, scoped, tag = 'input window, operand 1, single buffered']
    #allocation6 [shape = 's32[1]{0}', space=sflag, size = 0x4, scoped, tag = 'scoped memory for tpu_custom_call.1']
    #allocation7 [shape = 'u8[65536]{0}', space=vmem, size = 0x10000, scoped, tag = 'input window, operand 3, single buffered']
    #allocation8 [shape = 'u8[8192]{0}', space=vmem, size = 0x2000, scoped, tag = 'output window, operand 0, single buffered']
    %10 = vsyncpa [#allocation3], 0
    %11 = vsyncpa [#allocation6], 0
    %12 = vsyncpa [#allocation4], 0
    // Predicated region
    $region2: #{tpu_custom_call.1} parent=1 // pred_check
      _
    $region3: #{tpu_custom_call.1} parent=1 // pred_check_branch
      %14 = sbr.rel (0) target = $region5
    $region4: #{tpu_custom_call.1} parent=1 // pred_region
      %s16 = ssub.s32 256, 256
      %17 = vsyncadd [#allocation3], %s16
      %s18 = sshll.u32 [#allocation2], 4
      %s19 = int_to_ptr.vmem [resolvable:$true] %s18
      %24 = dma.hbm_to_vmem [thread:$0]  %s0, 256, %s19, [#allocation3], 128, 128, 8
    $region5: #{tpu_custom_call.1} parent=1 // pred_fallthru
      _
    // Predicated region
    $region6: #{tpu_custom_call.1} parent=1 // pred_check
      _
    $region7: #{tpu_custom_call.1} parent=1 // pred_check_branch
      %26 = sbr.rel (0) target = $region9
    $region8: #{tpu_custom_call.1} parent=1 // pred_region
      %s28 = ssub.s32 2048, 2048
      %29 = vsyncadd [#allocation6], %s28
      %s30 = sshll.u32 [#allocation5], 4
      %s31 = int_to_ptr.vmem [resolvable:$true] %s30
      %36 = dma.hbm_to_vmem [thread:$0]  %s1, 2048, %s31, [#allocation6], 128, 128, 8
    $region9: #{tpu_custom_call.1} parent=1 // pred_fallthru
      _
    // Predicated region
    $region10: #{tpu_custom_call.1} parent=1 // pred_check
      _
    $region11: #{tpu_custom_call.1} parent=1 // pred_check_branch
      %38 = sbr.rel (0) target = $region13
    $region12: #{tpu_custom_call.1} parent=1 // pred_region
      _
    $region13: #{tpu_custom_call.1} parent=1 // pred_fallthru
      _
    // Predicated region
    $region14: #{tpu_custom_call.1} parent=1 // pred_check
      _
    $region15: #{tpu_custom_call.1} parent=1 // pred_check_branch
      %40 = sbr.rel (0) target = $region17
    $region16: #{tpu_custom_call.1} parent=1 // pred_region
      %s42 = ssub.s32 2048, 2048
      %43 = vsyncadd [#allocation6], %s42
      %s44 = sshll.u32 [#allocation7], 4
      %s45 = int_to_ptr.vmem [resolvable:$true] %s44
      %50 = dma.hbm_to_vmem [thread:$0]  %s3, 2048, %s45, [#allocation6], 128, 128, 8
    $region17: #{tpu_custom_call.1} parent=1 // pred_fallthru
      _
    // Predicated region
    $region18: #{tpu_custom_call.1} parent=1 // pred_check
      _
    $region19: #{tpu_custom_call.1} parent=1 // pred_check_branch
      %52 = sbr.rel (0) target = $region21
    $region20: #{tpu_custom_call.1} parent=1 // pred_region
      _
    $region21: #{tpu_custom_call.1} parent=1 // pred_fallthru
      _
    // Predicated region
    $region22: #{tpu_custom_call.1} parent=1 // pred_check
      _
    $region23: #{tpu_custom_call.1} parent=1 // pred_check_branch
      %54 = sbr.rel (0) target = $region25
    $region24: #{tpu_custom_call.1} parent=1 // pred_region
      %55 = dma.done [#allocation3], 256
    $region25: #{tpu_custom_call.1} parent=1 // pred_fallthru
      _
    // Predicated region
    $region26: #{tpu_custom_call.1} parent=1 // pred_check
      _
    $region27: #{tpu_custom_call.1} parent=1 // pred_check_branch
      %57 = sbr.rel (0) target = $region29
    $region28: #{tpu_custom_call.1} parent=1 // pred_region
      %58 = dma.done [#allocation6], 2048
    $region29: #{tpu_custom_call.1} parent=1 // pred_fallthru
      _
    // Predicated region
    $region30: #{tpu_custom_call.1} parent=1 // pred_check
      _
    $region31: #{tpu_custom_call.1} parent=1 // pred_check_branch
      %60 = sbr.rel (0) target = $region33
    $region32: #{tpu_custom_call.1} parent=1 // pred_region
      %61 = dma.done [#allocation6], 2048
    $region33: #{tpu_custom_call.1} parent=1 // pred_fallthru
      _
    %v62 = vld [vmem:[#allocation2] sm:$0xff]
    %v63 = vld [vmem:[#allocation2 + $0x8] sm:$0xff]
    %v64 = vld [vmem:[#allocation5] sm:$0xff]
    %v65 = vld [vmem:[#allocation5 + $0x8] sm:$0xff]
    %v66 = vld [vmem:[#allocation5 + $0x10] sm:$0xff]
    %v67 = vld [vmem:[#allocation5 + $0x18] sm:$0xff]
    %v68 = vld [vmem:[#allocation5 + $0x20] sm:$0xff]
    %v69 = vld [vmem:[#allocation5 + $0x28] sm:$0xff]
    %v70 = vld [vmem:[#allocation5 + $0x30] sm:$0xff]
    %v71 = vld [vmem:[#allocation5 + $0x38] sm:$0xff]
    %v72 = vld [vmem:[#allocation5 + $0x40] sm:$0xff]
    %v73 = vld [vmem:[#allocation5 + $0x48] sm:$0xff]
    %v74 = vld [vmem:[#allocation5 + $0x50] sm:$0xff]
    %v75 = vld [vmem:[#allocation5 + $0x58] sm:$0xff]
    %v76 = vld [vmem:[#allocation5 + $0x60] sm:$0xff]
    %v77 = vld [vmem:[#allocation5 + $0x68] sm:$0xff]
    %v78 = vld [vmem:[#allocation5 + $0x70] sm:$0xff]
    %v79 = vld [vmem:[#allocation5 + $0x78] sm:$0xff]
    %v80 = vld [vmem:[%s2] sm:$0x1]
    %v82 = vlaneseq
    %v83 = vshrl.u32 %v82, 7
    %v84 = vsub.s32 0, %v83
    %v85 = vrot.slane %v80, %v84
    %87 = vmatprep.subr.mxu0 0.0
    %88 = vmatpush1.msra.mxu0 %v64
    %89 = vmatprep.subr.mxu0 0.0
    %90 = vmatpush1.msra.mxu0 %v65
    %91 = vmatprep.subr.mxu0 0.0
    %92 = vmatpush1.msra.mxu0 %v66
    %93 = vmatprep.subr.mxu0 0.0
    %94 = vmatpush1.msra.mxu0 %v67
    %95 = vmatprep.subr.mxu0 0.0
    %96 = vmatpush1.msra.mxu0 %v68
    %97 = vmatprep.subr.mxu0 0.0
    %98 = vmatpush1.msra.mxu0 %v69
    %99 = vmatprep.subr.mxu0 0.0
    %100 = vmatpush1.msra.mxu0 %v70
    %101 = vmatprep.subr.mxu0 0.0
    %102 = vmatpush1.msra.mxu0 %v71
    %103 = vmatprep.subr.mxu0 0.0
    %104 = vmatpush1.msra.mxu0 %v72
    %105 = vmatprep.subr.mxu0 0.0
    %106 = vmatpush1.msra.mxu0 %v73
    %107 = vmatprep.subr.mxu0 0.0
    %108 = vmatpush1.msra.mxu0 %v74
    %109 = vmatprep.subr.mxu0 0.0
    %110 = vmatpush1.msra.mxu0 %v75
    %111 = vmatprep.subr.mxu0 0.0
    %112 = vmatpush1.msra.mxu0 %v76
    %113 = vmatprep.subr.mxu0 0.0
    %114 = vmatpush1.msra.mxu0 %v77
    %115 = vmatprep.subr.mxu0 0.0
    %116 = vmatpush1.msra.mxu0 %v78
    %117 = vmatprep.subr.mxu0 0.0
    %118 = vmatpush1.msra.mxu0 %v79
    %119 = vmatprep.subr.mxu0 0.0
    %120 = vmatpush1.msra.mxu0 0.0
    %121 = vmatprep.subr.mxu0 0.0
    %122 = vmatpush1.msra.mxu0 0.0
    %123 = vmatprep.subr.mxu0 0.0
    %124 = vmatpush1.msra.mxu0 0.0
    %125 = vmatprep.subr.mxu0 0.0
    %126 = vmatpush1.msra.mxu0 0.0
    %127 = vmatprep.subr.mxu0 0.0
    %128 = vmatpush1.msra.mxu0 0.0
    %129 = vmatprep.subr.mxu0 0.0
    %130 = vmatpush1.msra.mxu0 0.0
    %131 = vmatprep.subr.mxu0 0.0
    %132 = vmatpush1.msra.mxu0 0.0
    %133 = vmatprep.subr.mxu0 0.0
    %134 = vmatpush1.msra.mxu0 0.0
    %135 = vmatprep.subr.mxu0 0.0
    %136 = vmatpush1.msra.mxu0 0.0
    %137 = vmatprep.subr.mxu0 0.0
    %138 = vmatpush1.msra.mxu0 0.0
    %139 = vmatprep.subr.mxu0 0.0
    %140 = vmatpush1.msra.mxu0 0.0
    %141 = vmatprep.subr.mxu0 0.0
    %142 = vmatpush1.msra.mxu0 0.0
    %143 = vmatprep.subr.mxu0 0.0
    %144 = vmatpush1.msra.mxu0 0.0
    %145 = vmatprep.subr.mxu0 0.0
    %146 = vmatpush1.msra.mxu0 0.0
    %147 = vmatprep.subr.mxu0 0.0
    %148 = vmatpush1.msra.mxu0 0.0
    %149 = vmatprep.subr.mxu0 0.0
    %150 = vmatpush1.msra.mxu0 0.0
    %151 = vmatprep.mubr.f32.mxu0 0.0
    %152 = vmatmul.mubr.f32.gmra.mrb[0].mxu0 %v62
    %v153 = vpop.f32.mrb[0].mxu0
    %v154 = vadd.f32 %v85, %v153
    %v155 = vpop.f32.mrb[0].mxu0
    %156 = vmatprep.mubr.f32.mxu0 0.0
    %157 = vmatmul.mubr.f32.gmra.mrb[0].mxu0 %v63
    %v158 = vpop.f32.mrb[0].mxu0
    %v159 = vadd.f32 %v85, %v158
    %v160 = vpop.f32.mrb[0].mxu0
    %161 = vdwg.mxu0
    %v162 = vmax.f32 %v154, 0.0
    %v163 = vmax.f32 %v159, 0.0
    %v164 = vld [vmem:[#allocation7] sm:$0xff]
    %v165 = vld [vmem:[#allocation7 + $0x8] sm:$0xff]
    %v166 = vld [vmem:[#allocation7 + $0x10] sm:$0xff]
    %v167 = vld [vmem:[#allocation7 + $0x18] sm:$0xff]
    %v168 = vld [vmem:[#allocation7 + $0x20] sm:$0xff]
    %v169 = vld [vmem:[#allocation7 + $0x28] sm:$0xff]
    %v170 = vld [vmem:[#allocation7 + $0x30] sm:$0xff]
    %v171 = vld [vmem:[#allocation7 + $0x38] sm:$0xff]
    %v172 = vld [vmem:[#allocation7 + $0x40] sm:$0xff]
    %v173 = vld [vmem:[#allocation7 + $0x48] sm:$0xff]
    %v174 = vld [vmem:[#allocation7 + $0x50] sm:$0xff]
    %v175 = vld [vmem:[#allocation7 + $0x58] sm:$0xff]
    %v176 = vld [vmem:[#allocation7 + $0x60] sm:$0xff]
    %v177 = vld [vmem:[#allocation7 + $0x68] sm:$0xff]
    %v178 = vld [vmem:[#allocation7 + $0x70] sm:$0xff]
    %v179 = vld [vmem:[#allocation7 + $0x78] sm:$0xff]
    %v180 = vld [vmem:[%s4] sm:$0x1]
    %v182 = vlaneseq
    %v183 = vshrl.u32 %v182, 7
    %v184 = vsub.s32 0, %v183
    %v185 = vrot.slane %v180, %v184
    %187 = vmatprep.subr.mxu0 0.0
    %188 = vmatpush1.msra.mxu0 %v164
    %189 = vmatprep.subr.mxu0 0.0
    %190 = vmatpush1.msra.mxu0 %v165
    %191 = vmatprep.subr.mxu0 0.0
    %192 = vmatpush1.msra.mxu0 %v166
    %193 = vmatprep.subr.mxu0 0.0
    %194 = vmatpush1.msra.mxu0 %v167
    %195 = vmatprep.subr.mxu0 0.0
    %196 = vmatpush1.msra.mxu0 %v168
    %197 = vmatprep.subr.mxu0 0.0
    %198 = vmatpush1.msra.mxu0 %v169
    %199 = vmatprep.subr.mxu0 0.0
    %200 = vmatpush1.msra.mxu0 %v170
    %201 = vmatprep.subr.mxu0 0.0
    %202 = vmatpush1.msra.mxu0 %v171
    %203 = vmatprep.subr.mxu0 0.0
    %204 = vmatpush1.msra.mxu0 %v172
    %205 = vmatprep.subr.mxu0 0.0
    %206 = vmatpush1.msra.mxu0 %v173
    %207 = vmatprep.subr.mxu0 0.0
    %208 = vmatpush1.msra.mxu0 %v174
    %209 = vmatprep.subr.mxu0 0.0
    %210 = vmatpush1.msra.mxu0 %v175
    %211 = vmatprep.subr.mxu0 0.0
    %212 = vmatpush1.msra.mxu0 %v176
    %213 = vmatprep.subr.mxu0 0.0
    %214 = vmatpush1.msra.mxu0 %v177
    %215 = vmatprep.subr.mxu0 0.0
    %216 = vmatpush1.msra.mxu0 %v178
    %217 = vmatprep.subr.mxu0 0.0
    %218 = vmatpush1.msra.mxu0 %v179
    %219 = vmatprep.subr.mxu0 0.0
    %220 = vmatpush1.msra.mxu0 0.0
    %221 = vmatprep.subr.mxu0 0.0
    %222 = vmatpush1.msra.mxu0 0.0
    %223 = vmatprep.subr.mxu0 0.0
    %224 = vmatpush1.msra.mxu0 0.0
    %225 = vmatprep.subr.mxu0 0.0
    %226 = vmatpush1.msra.mxu0 0.0
    %227 = vmatprep.subr.mxu0 0.0
    %228 = vmatpush1.msra.mxu0 0.0
    %229 = vmatprep.subr.mxu0 0.0
    %230 = vmatpush1.msra.mxu0 0.0
    %231 = vmatprep.subr.mxu0 0.0
    %232 = vmatpush1.msra.mxu0 0.0
    %233 = vmatprep.subr.mxu0 0.0
    %234 = vmatpush1.msra.mxu0 0.0
    %235 = vmatprep.subr.mxu0 0.0
    %236 = vmatpush1.msra.mxu0 0.0
    %237 = vmatprep.subr.mxu0 0.0
    %238 = vmatpush1.msra.mxu0 0.0
    %239 = vmatprep.subr.mxu0 0.0
    %240 = vmatpush1.msra.mxu0 0.0
    %241 = vmatprep.subr.mxu0 0.0
    %242 = vmatpush1.msra.mxu0 0.0
    %243 = vmatprep.subr.mxu0 0.0
    %244 = vmatpush1.msra.mxu0 0.0
    %245 = vmatprep.subr.mxu0 0.0
    %246 = vmatpush1.msra.mxu0 0.0
    %247 = vmatprep.subr.mxu0 0.0
    %248 = vmatpush1.msra.mxu0 0.0
    %249 = vmatprep.subr.mxu0 0.0
    %250 = vmatpush1.msra.mxu0 0.0
    %251 = vmatprep.mubr.f32.mxu0 0.0
    %252 = vmatmul.mubr.f32.gmra.mrb[0].mxu0 %v162
    %v253 = vpop.f32.mrb[0].mxu0
    %v254 = vadd.f32 %v185, %v253
    %v255 = vpop.f32.mrb[0].mxu0
    %256 = vmatprep.mubr.f32.mxu0 0.0
    %257 = vmatmul.mubr.f32.gmra.mrb[0].mxu0 %v163
    %v258 = vpop.f32.mrb[0].mxu0
    %v259 = vadd.f32 %v185, %v258
    %v260 = vpop.f32.mrb[0].mxu0
    %261 = vdwg.mxu0
    %262 = vst [vmem:[#allocation8] sm:$0xff] %v254
    %263 = vst [vmem:[#allocation8 + $0x8] sm:$0xff] %v259
    // Predicated region
    $region34: #{tpu_custom_call.1} parent=1 // pred_check
      _
    $region35: #{tpu_custom_call.1} parent=1 // pred_check_branch
      %265 = sbr.rel (0) target = $region37
    $region36: #{tpu_custom_call.1} parent=1 // pred_region
      %s267 = ssub.s32 256, 256
      %268 = vsyncadd [#allocation4], %s267
      %s269 = sshll.u32 [#allocation8], 4
      %s270 = int_to_ptr.vmem [resolvable:$true] %s269
      %275 = dma.vmem_to_hbm [thread:$0]  %s270, 256, %s5, [#allocation4], 128, 128, 8
    $region37: #{tpu_custom_call.1} parent=1 // pred_fallthru
      _
    // Predicated region
    $region38: #{tpu_custom_call.1} parent=1 // pred_check
      _
    $region39: #{tpu_custom_call.1} parent=1 // pred_check_branch
      %277 = sbr.rel (0) target = $region41
    $region40: #{tpu_custom_call.1} parent=1 // pred_region
      %278 = dma.done [#allocation4], 256
    $region41: #{tpu_custom_call.1} parent=1 // pred_fallthru
      _
    %279 = vsyncpa [#allocation3], 1
    %280 = vsyncpa [#allocation6], 1
    %281 = vsyncpa [#allocation4], 1

</llo_original>
